<compile_context>
chip_gen: v5e
topology: v5e:2x2
jax: 0.10.0
libtpu: 0.0.40
codegen_flags: <defaults>
</compile_context>

<pallas_src>
import jax
import jax.numpy as jnp
from jax.experimental import pallas as pl
from jax.experimental.pallas import tpu as pltpu

LATENT_DIM = 8
WIDTH = 8
DEPTH = 7
TOTAL = LATENT_DIM + DEPTH * WIDTH  # 64
EPS = 1e-5
NEG_SLOPE = 0.01  # PyTorch LeakyReLU default


def disc_latent_kernel(x_ref, noise_ref, w_ref, gamma_ref, beta_ref,
                       wcx_ref, wcp_ref, bc_ref, out_ref, buf_ref):
    # Per-grid-step shapes (batch on lanes):
    #   x_ref     (LATENT_DIM, N)  resident      noise_ref (WIDTH, N)  bf16, streamed
    #   w_ref     (WIDTH, TOTAL)   zero-padded columns beyond this layer's fan-in
    #   gamma/beta (WIDTH, 1)      wcx_ref (1, LATENT_DIM)   wcp_ref (1, WIDTH)
    #   bc_ref    (1, 1)           out_ref (1, N) resident accumulator
    #   buf_ref   (TOTAL, N) f32 VMEM scratch, persists across the DEPTH grid
    i = pl.program_id(0)
    n = x_ref.shape[1]
    inv_n = 1.0 / float(n)

    @pl.when(i == 0)
    def _init():
        # Drop x into the first LATENT_DIM rows; zero the rest once so the zero-padded
        # weight columns never multiply stale VMEM (0 * NaN = NaN).
        buf_ref[0:LATENT_DIM, :] = x_ref[...]
        buf_ref[LATENT_DIM:, :] = jnp.zeros((TOTAL - LATENT_DIM, n), jnp.float32)
        # Classifier contribution of x; per-layer contributions are accumulated below.
        out_ref[...] = jnp.dot(wcx_ref[...], x_ref[...],
                               preferred_element_type=jnp.float32)

    # --- Linear (bias omitted: it cancels exactly inside training-mode BatchNorm) ---
    # Uniform (8,64)x(64,N) MXU matmul; padded weight columns are zero and the rows
    # they touch are zero until written, so only the live prefix contributes.
    y = jnp.dot(w_ref[...], buf_ref[...], preferred_element_type=jnp.float32)  # (W, N)

    # --- BatchNorm1d, training mode, biased var — two-pass (cancellation-safe) ---
    mean = jnp.sum(y, axis=1, keepdims=True) * inv_n          # (W, 1)
    yc = y - mean
    var = jnp.sum(yc * yc, axis=1, keepdims=True) * inv_n     # (W, 1)
    scale = gamma_ref[...] * jax.lax.rsqrt(var + EPS)          # (W, 1)
    y = yc * scale + beta_ref[...]

    # --- LeakyReLU(0.01): max(y, 0.01*y)  (slope < 1 makes this exact) ---
    y = jnp.maximum(y, NEG_SLOPE * y)

    # --- multiplicative Gaussian noise: randn * 0.02 + 1 (bf16 in HBM, f32 math) ---
    y = y * (noise_ref[...].astype(jnp.float32) * 0.02 + 1.0)

    # --- grow the concat buffer: 8-sublane-aligned dynamic full-row store ---
    row = pl.multiple_of(LATENT_DIM + i * WIDTH, WIDTH)
    buf_ref[pl.ds(row, WIDTH), :] = y

    # --- incremental classifier logits: (1,8)x(8,N) on the otherwise idle MXU ---
    out_ref[...] += jnp.dot(wcp_ref[...], y, preferred_element_type=jnp.float32)

    @pl.when(i == pl.num_programs(0) - 1)
    def _final():
        logits = out_ref[...] + bc_ref[...]
        # Sigmoid via tanh: exact, and runs on the EUP slot instead of a VPU divide.
        out_ref[...] = 0.5 * jnp.tanh(0.5 * logits) + 0.5


def _vmem_limit_bytes(n):
    """Explicit VMEM budget: activations scale with batch; params are KiB-scale."""
    per_col = (
        4 * TOTAL            # (TOTAL, n) f32 concat scratch
        + 4 * LATENT_DIM     # resident (LATENT_DIM, n) f32 x block
        + 2 * 2 * WIDTH      # double-buffered (WIDTH, n) bf16 noise blocks
        + 2 * 4              # (1, n) f32 output block (+ headroom)
        + 4 * 4 * WIDTH      # a few (WIDTH, n) f32 temporaries / spill headroom
    )
    need = int(1.3 * per_col * n) + (4 << 20)      # 1.3x margin + 4 MiB slack
    try:
        cap = int(0.9 * pltpu.get_tpu_info().vmem_capacity_bytes)
    except Exception:
        cap = 56 << 20       # conservative fallback: fits v7x's 64 MiB physical VMEM/TC
    if need > cap:
        # TODO(synk): batch-tiled two-pass BN + v7x dual-TensorCore split instead of
        # hard-failing for very large batches.
        raise ValueError(
            f"Batch {n} too large for the single-call exact-BatchNorm kernel "
            f"(~{need >> 20} MiB VMEM needed, cap {cap >> 20} MiB).")
    return min(max(need, 32 << 20), cap)


def discriminator_latent(x, noise, params):
    """x: (N, LATENT_DIM); noise: (DEPTH, WIDTH, N) feature-major (bf16 or f32) -> (N, 1)."""
    n = x.shape[0]
    assert noise.shape == (DEPTH, WIDTH, n), noise.shape
    # Only the tiny x is transposed wrapper-side (32*N bytes); the dominant noise stream
    # is consumed directly in its stored feature-major layout.
    x_t = x.T.astype(jnp.float32)                  # (LATENT_DIM, N)

    grid_spec = pltpu.PrefetchScalarGridSpec(
        num_scalar_prefetch=0,
        grid=(DEPTH,),
        in_specs=[
            pl.BlockSpec((LATENT_DIM, n), lambda i: (0, 0)),          # x (resident)
            pl.BlockSpec((None, WIDTH, n), lambda i: (i, 0, 0)),      # noise (streamed)
            pl.BlockSpec((None, WIDTH, TOTAL), lambda i: (i, 0, 0)),  # layer weight
            pl.BlockSpec((None, WIDTH, 1), lambda i: (i, 0, 0)),      # gamma
            pl.BlockSpec((None, WIDTH, 1), lambda i: (i, 0, 0)),      # beta
            pl.BlockSpec((1, LATENT_DIM), lambda i: (0, 0)),          # wc_x (resident)
            pl.BlockSpec((None, 1, WIDTH), lambda i: (i, 0, 0)),      # wc_p slice
            pl.BlockSpec((1, 1), lambda i: (0, 0)),                   # bc (resident)
        ],
        out_specs=pl.BlockSpec((1, n), lambda i: (0, 0)),             # resident logits/out
        scratch_shapes=[pltpu.VMEM((TOTAL, n), jnp.float32)],
    )

    out_t = pl.pallas_call(
        disc_latent_kernel,
        out_shape=jax.ShapeDtypeStruct((1, n), jnp.float32),
        grid_spec=grid_spec,
        compiler_params=pltpu.CompilerParams(
            dimension_semantics=("arbitrary",),        # buf/out carry across layers
            vmem_limit_bytes=_vmem_limit_bytes(n)),
    )(x_t, noise, params["wp"], params["gamma"], params["beta"],
      params["wc_x"], params["wc_p"], params["bc"])
    return out_t.T                                     # (N, 1)


def init_params(key):
    """Deterministic synthetic init (PyTorch-style uniform bounds); BN gamma=1, beta=0.
    wp[i] is the (WIDTH, TOTAL) zero-padded layer-i weight (feature-major)."""
    keys = jax.random.split(key, 2 * DEPTH + 2)
    wp = jnp.zeros((DEPTH, WIDTH, TOTAL), jnp.float32)
    bp = jnp.zeros((DEPTH, WIDTH), jnp.float32)
    for i in range(DEPTH):
        in_dim = LATENT_DIM + WIDTH * i
        bound = 1.0 / float(in_dim) ** 0.5
        w_i = jax.random.uniform(keys[2 * i], (WIDTH, in_dim), jnp.float32,
                                 minval=-bound, maxval=bound)
        b_i = jax.random.uniform(keys[2 * i + 1], (WIDTH,), jnp.float32,
                                 minval=-bound, maxval=bound)
        wp = wp.at[i, :, :in_dim].set(w_i)
        bp = bp.at[i].set(b_i)
    gamma = jnp.ones((DEPTH, WIDTH, 1), jnp.float32)
    beta = jnp.zeros((DEPTH, WIDTH, 1), jnp.float32)
    bound = 1.0 / float(TOTAL) ** 0.5
    wc = jax.random.uniform(keys[-2], (1, TOTAL), jnp.float32, minval=-bound, maxval=bound)
    bc = jax.random.uniform(keys[-1], (1, 1), jnp.float32, minval=-bound, maxval=bound)
    return {
        "wp": wp, "bp": bp, "gamma": gamma, "beta": beta, "wc": wc, "bc": bc,
        # Classifier weight split for incremental in-kernel logit accumulation.
        "wc_x": wc[:, :LATENT_DIM],                            # (1, LATENT_DIM)
        "wc_p": wc[0, LATENT_DIM:].reshape(DEPTH, 1, WIDTH),   # (DEPTH, 1, WIDTH)
    }


def reference_forward(x, noise, p):
    """Pure-JAX reference mirroring the PyTorch forward (training-mode BN), batch-major.
    Includes the linear bias (which cancels inside BN) and the full classifier weight."""
    nf = noise.astype(jnp.float32)                      # (DEPTH, WIDTH, N)
    last = x
    for i in range(DEPTH):
        in_dim = LATENT_DIM + WIDTH * i
        w = p["wp"][i, :, :in_dim]                      # (WIDTH, in_dim)
        y = last @ w.T + p["bp"][i]
        mean = y.mean(axis=0, keepdims=True)
        var = ((y - mean) ** 2).mean(axis=0, keepdims=True)
        y = (y - mean) / jnp.sqrt(var + EPS) * p["gamma"][i, :, 0] + p["beta"][i, :, 0]
        y = jnp.where(y >= 0, y, NEG_SLOPE * y)
        y = y * (nf[i].T * 0.02 + 1.0)
        last = jnp.concatenate([last, y], axis=-1)
    return jax.nn.sigmoid(last @ p["wc"].T + p["bc"][0, 0])


if __name__ == "__main__":
    key = jax.random.PRNGKey(0)
    k_x, k_noise, k_params = jax.random.split(key, 3)

    N = 256  # lane-aligned batch (multiple of 128) so the (8,N)/(1,N) tiles are full vregs
    x = jax.random.normal(k_x, (N, LATENT_DIM), jnp.float32)
    # Noise for the 7 multiplicative-noise injections: generated feature-major and in
    # bf16 so the kernel consumes it directly (no wrapper transpose, half the HBM bytes).
    noise = jax.random.normal(k_noise, (DEPTH, WIDTH, N), jnp.bfloat16)
    params = init_params(k_params)

    out = jax.block_until_ready(discriminator_latent(x, noise, params))
    ref = reference_forward(x, noise, params)

    assert out.shape == (N, 1), out.shape
    max_err = float(jnp.abs(out - ref).max())
    assert jnp.allclose(out, ref, atol=1e-4, rtol=1e-4), max_err
    print("KERNEL_OK")
</pallas_src>

<mosaic_0001>
module attributes {stable_mosaic.version = 11 : i64} {
  func.func @disc_latent_kernel(%arg0: i32, %arg1: memref<8x256xf32, #tpu.memory_space<vmem>>, %arg2: memref<1x8x256xbf16, #tpu.memory_space<vmem>>, %arg3: memref<1x8x64xf32, #tpu.memory_space<vmem>>, %arg4: memref<1x8x1xf32, #tpu.memory_space<vmem>>, %arg5: memref<1x8x1xf32, #tpu.memory_space<vmem>>, %arg6: memref<1x8xf32, #tpu.memory_space<vmem>>, %arg7: memref<1x1x8xf32, #tpu.memory_space<vmem>>, %arg8: memref<1x1xf32, #tpu.memory_space<vmem>>, %arg9: memref<1x256xf32, #tpu.memory_space<vmem>>, %arg10: memref<64x256xf32, #tpu.memory_space<vmem>>) attributes {dimension_semantics = [#tpu.dimension_semantics<arbitrary>], iteration_bounds = array<i64: 7>, scalar_prefetch = 0 : i64, scratch_operands = 1 : i64, tpu.core_type = #tpu.core_type<tc>, window_params = [{pipeline_mode = #tpu.pipeline_mode<synchronous>, transform_indices = @transform_0, window_bounds = array<i64: 8, 256>}, {transform_indices = @transform_1, window_bounds = array<i64: 1, 8, 256>}, {transform_indices = @transform_2, window_bounds = array<i64: 1, 8, 64>}, {transform_indices = @transform_3, window_bounds = array<i64: 1, 8, 1>}, {transform_indices = @transform_4, window_bounds = array<i64: 1, 8, 1>}, {pipeline_mode = #tpu.pipeline_mode<synchronous>, transform_indices = @transform_5, window_bounds = array<i64: 1, 8>}, {transform_indices = @transform_6, window_bounds = array<i64: 1, 1, 8>}, {pipeline_mode = #tpu.pipeline_mode<synchronous>, transform_indices = @transform_7, window_bounds = array<i64: 1, 1>}, {pipeline_mode = #tpu.pipeline_mode<synchronous>, transform_indices = @transform_8, window_bounds = array<i64: 1, 256>}]} {
    %c0_i32 = arith.constant 0 : i32
    %0 = arith.cmpi eq, %arg0, %c0_i32 : i32
    %1 = arith.extui %0 : i1 to i32
    %c0_i32_0 = arith.constant 0 : i32
    %2 = arith.cmpi ne, %1, %c0_i32_0 : i32
    scf.if %2 {
      %c0_33 = arith.constant 0 : index
      %c0_34 = arith.constant 0 : index
      %55 = vector.load %arg1[%c0_33, %c0_34] : memref<8x256xf32, #tpu.memory_space<vmem>>, vector<8x256xf32>
      %c0_35 = arith.constant 0 : index
      %c0_36 = arith.constant 0 : index
      %56 = vector.load %arg10[%c0_35, %c0_36] : memref<64x256xf32, #tpu.memory_space<vmem>>, vector<8x256xf32>
      tpu.vector_store %arg10[%c0_35, %c0_36], %55 {strides = array<i32>} : memref<64x256xf32, #tpu.memory_space<vmem>>, vector<8x256xf32>,
      %cst_37 = arith.constant 0.000000e+00 : f32
      %57 = vector.broadcast %cst_37 : f32 to vector<56x256xf32>
      %c8 = arith.constant 8 : index
      %c0_38 = arith.constant 0 : index
      %58 = vector.load %arg10[%c8, %c0_38] : memref<64x256xf32, #tpu.memory_space<vmem>>, vector<56x256xf32>
      tpu.vector_store %arg10[%c8, %c0_38], %57 {strides = array<i32>} : memref<64x256xf32, #tpu.memory_space<vmem>>, vector<56x256xf32>,
      %c0_39 = arith.constant 0 : index
      %c0_40 = arith.constant 0 : index
      %59 = vector.load %arg6[%c0_39, %c0_40] : memref<1x8xf32, #tpu.memory_space<vmem>>, vector<1x8xf32>
      %c0_41 = arith.constant 0 : index
      %c0_42 = arith.constant 0 : index
      %60 = vector.load %arg1[%c0_41, %c0_42] : memref<8x256xf32, #tpu.memory_space<vmem>>, vector<8x256xf32>
      %cst_43 = arith.constant dense<0.000000e+00> : vector<1x256xf32>
      %61 = tpu.matmul %59, %60, %cst_43 {dimension_numbers = #tpu.dot_dimension_numbers<[1], [0], [0], [1], [0, 0, 1, 1], [], []>} : vector<1x8xf32>, vector<8x256xf32>, vector<1x256xf32> -> vector<1x256xf32>
      %c0_44 = arith.constant 0 : index
      %c0_45 = arith.constant 0 : index
      %62 = vector.load %arg9[%c0_44, %c0_45] : memref<1x256xf32, #tpu.memory_space<vmem>>, vector<1x256xf32>
      tpu.vector_store %arg9[%c0_44, %c0_45], %61 {strides = array<i32>} : memref<1x256xf32, #tpu.memory_space<vmem>>, vector<1x256xf32>,
    } else {
    }
    %c0 = arith.constant 0 : index
    %c0_1 = arith.constant 0 : index
    %c0_2 = arith.constant 0 : index
    %3 = vector.load %arg3[%c0, %c0_1, %c0_2] : memref<1x8x64xf32, #tpu.memory_space<vmem>>, vector<1x8x64xf32>
    %4 = vector.shape_cast %3 : vector<1x8x64xf32> to vector<8x64xf32>
    %c0_3 = arith.constant 0 : index
    %c0_4 = arith.constant 0 : index
    %5 = vector.load %arg10[%c0_3, %c0_4] : memref<64x256xf32, #tpu.memory_space<vmem>>, vector<64x256xf32>
    %cst = arith.constant dense<0.000000e+00> : vector<8x256xf32>
    %6 = tpu.matmul %4, %5, %cst {dimension_numbers = #tpu.dot_dimension_numbers<[1], [0], [0], [1], [0, 0, 1, 1], [], []>} : vector<8x64xf32>, vector<64x256xf32>, vector<8x256xf32> -> vector<8x256xf32>
    %cst_5 = arith.constant dense<0.000000e+00> : vector<8xf32>
    %7 = vector.multi_reduction <add>, %6, %cst_5 [1] : vector<8x256xf32> to vector<8xf32>
    %8 = vector.shape_cast %7 : vector<8xf32> to vector<8x1xf32>
    %cst_6 = arith.constant 3.906250e-03 : f32
    %9 = vector.broadcast %cst_6 : f32 to vector<8x1xf32>
    %10 = arith.mulf %8, %9 : vector<8x1xf32>
    %11 = vector.broadcast %10 : vector<8x1xf32> to vector<8x256xf32>
    %12 = arith.subf %6, %11 : vector<8x256xf32>
    %13 = arith.mulf %12, %12 : vector<8x256xf32>
    %cst_7 = arith.constant dense<0.000000e+00> : vector<8xf32>
    %14 = vector.multi_reduction <add>, %13, %cst_7 [1] : vector<8x256xf32> to vector<8xf32>
    %15 = vector.shape_cast %14 : vector<8xf32> to vector<8x1xf32>
    %cst_8 = arith.constant 3.906250e-03 : f32
    %16 = vector.broadcast %cst_8 : f32 to vector<8x1xf32>
    %17 = arith.mulf %15, %16 : vector<8x1xf32>
    %c0_9 = arith.constant 0 : index
    %c0_10 = arith.constant 0 : index
    %c0_11 = arith.constant 0 : index
    %18 = vector.load %arg4[%c0_9, %c0_10, %c0_11] : memref<1x8x1xf32, #tpu.memory_space<vmem>>, vector<1x8x1xf32>
    %19 = vector.shape_cast %18 : vector<1x8x1xf32> to vector<8x1xf32>
    %cst_12 = arith.constant 9.99999974E-6 : f32
    %20 = vector.broadcast %cst_12 : f32 to vector<8x1xf32>
    %21 = arith.addf %17, %20 : vector<8x1xf32>
    %22 = math.rsqrt %21 : vector<8x1xf32>
    %23 = arith.mulf %19, %22 : vector<8x1xf32>
    %24 = vector.broadcast %23 : vector<8x1xf32> to vector<8x256xf32>
    %25 = arith.mulf %12, %24 : vector<8x256xf32>
    %c0_13 = arith.constant 0 : index
    %c0_14 = arith.constant 0 : index
    %c0_15 = arith.constant 0 : index
    %26 = vector.load %arg5[%c0_13, %c0_14, %c0_15] : memref<1x8x1xf32, #tpu.memory_space<vmem>>, vector<1x8x1xf32>
    %27 = vector.shape_cast %26 : vector<1x8x1xf32> to vector<8x1xf32>
    %28 = vector.broadcast %27 : vector<8x1xf32> to vector<8x256xf32>
    %29 = arith.addf %25, %28 : vector<8x256xf32>
    %cst_16 = arith.constant 0.00999999977 : f32
    %30 = vector.broadcast %cst_16 : f32 to vector<8x256xf32>
    %31 = arith.mulf %30, %29 : vector<8x256xf32>
    %32 = arith.maximumf %29, %31 : vector<8x256xf32>
    %c0_17 = arith.constant 0 : index
    %c0_18 = arith.constant 0 : index
    %c0_19 = arith.constant 0 : index
    %33 = vector.load %arg2[%c0_17, %c0_18, %c0_19] : memref<1x8x256xbf16, #tpu.memory_space<vmem>>, vector<1x8x256xbf16>
    %34 = vector.shape_cast %33 : vector<1x8x256xbf16> to vector<8x256xbf16>
    %35 = arith.extf %34 : vector<8x256xbf16> to vector<8x256xf32>
    %cst_20 = arith.constant 2.000000e-02 : f32
    %36 = vector.broadcast %cst_20 : f32 to vector<8x256xf32>
    %37 = arith.mulf %35, %36 : vector<8x256xf32>
    %cst_21 = arith.constant 1.000000e+00 : f32
    %38 = vector.broadcast %cst_21 : f32 to vector<8x256xf32>
    %39 = arith.addf %37, %38 : vector<8x256xf32>
    %40 = arith.mulf %32, %39 : vector<8x256xf32>
    %c8_i32 = arith.constant 8 : i32
    %41 = arith.muli %arg0, %c8_i32 : i32
    %c8_i32_22 = arith.constant 8 : i32
    %42 = arith.addi %c8_i32_22, %41 : i32
    %43 = tpu.assume_multiple %42, 8 : i32
    %44 = arith.index_cast %43 : i32 to index
    %c0_23 = arith.constant 0 : index
    %45 = vector.load %arg10[%44, %c0_23] : memref<64x256xf32, #tpu.memory_space<vmem>>, vector<8x256xf32>
    tpu.vector_store %arg10[%44, %c0_23], %40 {strides = array<i32>} : memref<64x256xf32, #tpu.memory_space<vmem>>, vector<8x256xf32>,
    %c0_24 = arith.constant 0 : index
    %c0_25 = arith.constant 0 : index
    %46 = vector.load %arg9[%c0_24, %c0_25] : memref<1x256xf32, #tpu.memory_space<vmem>>, vector<1x256xf32>
    %c0_26 = arith.constant 0 : index
    %c0_27 = arith.constant 0 : index
    %c0_28 = arith.constant 0 : index
    %47 = vector.load %arg7[%c0_26, %c0_27, %c0_28] : memref<1x1x8xf32, #tpu.memory_space<vmem>>, vector<1x1x8xf32>
    %48 = vector.shape_cast %47 : vector<1x1x8xf32> to vector<1x8xf32>
    %cst_29 = arith.constant dense<0.000000e+00> : vector<1x256xf32>
    %49 = tpu.matmul %48, %40, %cst_29 {dimension_numbers = #tpu.dot_dimension_numbers<[1], [0], [0], [1], [0, 0, 1, 1], [], []>} : vector<1x8xf32>, vector<8x256xf32>, vector<1x256xf32> -> vector<1x256xf32>
    %50 = arith.addf %46, %49 : vector<1x256xf32>
    %c0_30 = arith.constant 0 : index
    %c0_31 = arith.constant 0 : index
    %51 = vector.load %arg9[%c0_30, %c0_31] : memref<1x256xf32, #tpu.memory_space<vmem>>, vector<1x256xf32>
    tpu.vector_store %arg9[%c0_30, %c0_31], %50 {strides = array<i32>} : memref<1x256xf32, #tpu.memory_space<vmem>>, vector<1x256xf32>,
    %c6_i32 = arith.constant 6 : i32
    %52 = arith.cmpi eq, %arg0, %c6_i32 : i32
    %53 = arith.extui %52 : i1 to i32
    %c0_i32_32 = arith.constant 0 : i32
    %54 = arith.cmpi ne, %53, %c0_i32_32 : i32
    scf.if %54 {
      %c0_33 = arith.constant 0 : index
      %c0_34 = arith.constant 0 : index
      %55 = vector.load %arg9[%c0_33, %c0_34] : memref<1x256xf32, #tpu.memory_space<vmem>>, vector<1x256xf32>
      %c0_35 = arith.constant 0 : index
      %c0_36 = arith.constant 0 : index
      %56 = vector.load %arg8[%c0_35, %c0_36] : memref<1x1xf32, #tpu.memory_space<vmem>>, vector<1x1xf32>
      %57 = vector.broadcast %56 : vector<1x1xf32> to vector<1x256xf32>
      %58 = arith.addf %55, %57 : vector<1x256xf32>
      %cst_37 = arith.constant 5.000000e-01 : f32
      %59 = vector.broadcast %cst_37 : f32 to vector<1x256xf32>
      %60 = arith.mulf %59, %58 : vector<1x256xf32>
      %61 = math.tanh %60 : vector<1x256xf32>
      %cst_38 = arith.constant 5.000000e-01 : f32
      %62 = vector.broadcast %cst_38 : f32 to vector<1x256xf32>
      %63 = arith.mulf %62, %61 : vector<1x256xf32>
      %cst_39 = arith.constant 5.000000e-01 : f32
      %64 = vector.broadcast %cst_39 : f32 to vector<1x256xf32>
      %65 = arith.addf %63, %64 : vector<1x256xf32>
      %c0_40 = arith.constant 0 : index
      %c0_41 = arith.constant 0 : index
      %66 = vector.load %arg9[%c0_40, %c0_41] : memref<1x256xf32, #tpu.memory_space<vmem>>, vector<1x256xf32>
      tpu.vector_store %arg9[%c0_40, %c0_41], %65 {strides = array<i32>} : memref<1x256xf32, #tpu.memory_space<vmem>>, vector<1x256xf32>,
    } else {
    }
    return
  }
  func.func @transform_0(%arg0: i32) -> (i32, i32) {
    %c0_i32 = arith.constant 0 : i32
    %c0_i32_0 = arith.constant 0 : i32
    %c0_i32_1 = arith.constant 0 : i32
    return %c0_i32, %c0_i32_0 : i32, i32
  }
  func.func @transform_1(%arg0: i32) -> (i32, i32, i32) {
    %c0_i32 = arith.constant 0 : i32
    %c0_i32_0 = arith.constant 0 : i32
    %c0_i32_1 = arith.constant 0 : i32
    return %arg0, %c0_i32, %c0_i32_0 : i32, i32, i32
  }
  func.func @transform_2(%arg0: i32) -> (i32, i32, i32) {
    %c0_i32 = arith.constant 0 : i32
    %c0_i32_0 = arith.constant 0 : i32
    %c0_i32_1 = arith.constant 0 : i32
    return %arg0, %c0_i32, %c0_i32_0 : i32, i32, i32
  }
  func.func @transform_3(%arg0: i32) -> (i32, i32, i32) {
    %c0_i32 = arith.constant 0 : i32
    %c0_i32_0 = arith.constant 0 : i32
    %c0_i32_1 = arith.constant 0 : i32
    return %arg0, %c0_i32, %c0_i32_0 : i32, i32, i32
  }
  func.func @transform_4(%arg0: i32) -> (i32, i32, i32) {
    %c0_i32 = arith.constant 0 : i32
    %c0_i32_0 = arith.constant 0 : i32
    %c0_i32_1 = arith.constant 0 : i32
    return %arg0, %c0_i32, %c0_i32_0 : i32, i32, i32
  }
  func.func @transform_5(%arg0: i32) -> (i32, i32) {
    %c0_i32 = arith.constant 0 : i32
    %c0_i32_0 = arith.constant 0 : i32
    %c0_i32_1 = arith.constant 0 : i32
    return %c0_i32, %c0_i32_0 : i32, i32
  }
  func.func @transform_6(%arg0: i32) -> (i32, i32, i32) {
    %c0_i32 = arith.constant 0 : i32
    %c0_i32_0 = arith.constant 0 : i32
    %c0_i32_1 = arith.constant 0 : i32
    return %arg0, %c0_i32, %c0_i32_0 : i32, i32, i32
  }
  func.func @transform_7(%arg0: i32) -> (i32, i32) {
    %c0_i32 = arith.constant 0 : i32
    %c0_i32_0 = arith.constant 0 : i32
    %c0_i32_1 = arith.constant 0 : i32
    return %c0_i32, %c0_i32_0 : i32, i32
  }
  func.func @transform_8(%arg0: i32) -> (i32, i32) {
    %c0_i32 = arith.constant 0 : i32
    %c0_i32_0 = arith.constant 0 : i32
    %c0_i32_1 = arith.constant 0 : i32
    return %c0_i32, %c0_i32_0 : i32, i32
  }
}

</mosaic_0001>

<llo_original>
// kernel: tpu_custom_call.1
$region0: #{tpu_custom_call.1}
  #allocation0 [shape = 'u32[]', space=smem, size = 0x4, offset = 0x4, fixed_abs, tag = 'smem constant byte address 0x4 - core index']
  #allocation1 [shape = 'u32[72,128]{1,0:T(1,128)}', space=vmem, size = 0x9000, scoped, tag = 'internal scratch']
  #allocation2 [shape = 'f32[64,256]{1,0:T(8,128)}', space=vmem, size = 0x10000, scoped, tag = 'scratch operand']
  #allocation3 [shape = 'f32[1,1]{1,0:T(1,128)S(1)}', space=vmem, size = 0x200, scoped, tag = 'scoped memory for tpu_custom_call.1']
  %s0 = inlined_call_operand.hbm [shape: f32[8,256], index: 0, kind: input, shape index: {}]
  %s1 = inlined_call_operand.vmem [shape: bf16[7,8,256], index: 1, kind: input, shape index: {}]
  %s2 = inlined_call_operand.vmem [shape: f32[7,8,64], index: 2, kind: input, shape index: {}]
  %s3 = inlined_call_operand.vmem [shape: f32[7,8,1], index: 3, kind: input, shape index: {}]
  %s4 = inlined_call_operand.vmem [shape: f32[7,8,1], index: 4, kind: input, shape index: {}]
  %s5 = inlined_call_operand.vmem [shape: f32[1,8], index: 5, kind: input, shape index: {}]
  %s6 = inlined_call_operand.vmem [shape: f32[7,1,8], index: 6, kind: input, shape index: {}]
  %s7 = inlined_call_operand.<no memory space> [shape: f32[1,1], index: 7, kind: input, shape index: {}]
  %s8 = inlined_call_operand.hbm [shape: f32[1,256], index: 8, kind: output, shape index: {}]
  %s9 = sld [smem:[#allocation0]]
  $region77: #{tpu_custom_call.1} parent=0
    _
  %s11 = ssub.s32 1, %s9
  %s12 = scalar_select 0, %s11, %s9
  %v13 = vstv %s7
  %14 = vst [vmem:[#allocation3] sm:$0x1] %v13
  $region1: #{tpu_custom_call.1} parent=0
    #allocation4 [shape = 'u8[8192]{0}', space=vmem, size = 0x2000, scoped, tag = 'input window, operand 0, single buffered']
    #allocation5 [shape = 's32[2]{0}', space=sflag, size = 0x8, scoped, tag = 'scoped memory for tpu_custom_call.1']
    #allocation6 [shape = 's32[2]{0}', space=sflag, size = 0x8, scoped, tag = 'scoped memory for tpu_custom_call.1']
    #allocation7 [shape = 'u8[1024]{0}', space=vmem, size = 0x400, scoped, tag = 'output window, operand 0, single buffered']
    %15 = vsyncpa [#allocation5], 0
    %16 = vsyncpa [#allocation6], 0
    loop: start=0, step=1, limit=9
    $region2: #{tpu_custom_call.1} parent=1 // loop_pre_header
      _
    $region3: #{tpu_custom_call.1} parent=1 // loop_header
      %s18 = sphi 0, %s22
      %p19 = scmp.ge.s32.totalorder %s18, 9
      %s26 = sphi 0, %s26
      %s28 = sphi 0, %s26
      %s29 = sphi 0, %s28
      %s43 = sphi 0, %s29
      %s49 = sphi 0, %s51
      %s52 = sphi 0, %s49
      %s53 = sphi 0, %s52
      %s69 = sphi 0, %s53
      %s75 = sphi 0, %s77
      %s78 = sphi 0, %s75
      %s79 = sphi 0, %s78
      %s95 = sphi 0, %s79
      %s101 = sphi 0, %s103
      %s104 = sphi 0, %s101
      %s105 = sphi 0, %s104
      %s121 = sphi 0, %s105
      %s127 = sphi 0, %s129
      %s130 = sphi 0, %s127
      %s131 = sphi 0, %s130
      %s147 = sphi 0, %s131
      %s151 = sphi 0, %s151
      %s153 = sphi 0, %s151
      %s154 = sphi 0, %s153
      %s168 = sphi 0, %s154
      %s174 = sphi 0, %s176
      %s177 = sphi 0, %s174
      %s178 = sphi 0, %s177
      %s194 = sphi 0, %s178
      %s198 = sphi 0, %s198
      %s200 = sphi 0, %s198
      %s201 = sphi 0, %s200
      %s215 = sphi 0, %s201
      %s219 = sphi 0, %s219
      %s221 = sphi 0, %s219
      %s222 = sphi 0, %s221
      %s236 = sphi 0, %s222
    $region4: #{tpu_custom_call.1} parent=1 // loop_header_branch
      %21 = sbr.rel (%p19) target = $region8
    $region5: #{tpu_custom_call.1} parent=1 // loop_body
      %s23 = ssub.s32 %s18, 1
      %s24 = ssub.s32 %s18, 2
      %s25 = sadd.s32 %s18, 1
      %s27 = sadd.s32 %s26, 1
      %p30 = scmp.eq.s32.totalorder %s18, 6
      %p31 = scmp.ne.s32.totalorder %s26, %s28
      %p32 = scmp.eq.s32.totalorder %s18, 0
      %p33 = por %p31, %p32
      %p34 = scmp.ne.s32.totalorder %s26, %s28
      %p35 = scmp.eq.s32.totalorder %s23, 6
      %p36 = por %p34, %p35
      %p37 = scmp.ne.s32.totalorder %s28, %s29
      %p38 = scmp.eq.s32.totalorder %s23, 0
      %p39 = por %p37, %p38
      %p40 = scmp.ne.s32.totalorder %s28, %s29
      %p41 = scmp.eq.s32.totalorder %s24, 6
      %p42 = por %p40, %p41
      %p44 = scmp.ne.s32.totalorder %s29, %s43
      %p45 = scmp.eq.s32.totalorder %s24, 0
      %p46 = por %p44, %p45
      %s47 = ssub.s32 %s18, %s25
      %p48 = scmp.eq.s32.totalorder %s47, 0
      %s50 = sadd.s32 %s49, 1
      %s51 = scalar_select %p48, %s49, %s50
      %p54 = pneg %p48
      %p55 = scmp.eq.s32.totalorder %s18, 6
      %p56 = por %p54, %p55
      %p57 = scmp.ne.s32.totalorder %s49, %s52
      %p58 = scmp.eq.s32.totalorder %s18, 0
      %p59 = por %p57, %p58
      %p60 = scmp.ne.s32.totalorder %s49, %s52
      %p61 = scmp.eq.s32.totalorder %s23, 6
      %p62 = por %p60, %p61
      %p63 = scmp.ne.s32.totalorder %s52, %s53
      %p64 = scmp.eq.s32.totalorder %s23, 0
      %p65 = por %p63, %p64
      %p66 = scmp.ne.s32.totalorder %s52, %s53
      %p67 = scmp.eq.s32.totalorder %s24, 6
      %p68 = por %p66, %p67
      %p70 = scmp.ne.s32.totalorder %s53, %s69
      %p71 = scmp.eq.s32.totalorder %s24, 0
      %p72 = por %p70, %p71
      %s73 = ssub.s32 %s18, %s25
      %p74 = scmp.eq.s32.totalorder %s73, 0
      %s76 = sadd.s32 %s75, 1
      %s77 = scalar_select %p74, %s75, %s76
      %p80 = pneg %p74
      %p81 = scmp.eq.s32.totalorder %s18, 6
      %p82 = por %p80, %p81
      %p83 = scmp.ne.s32.totalorder %s75, %s78
      %p84 = scmp.eq.s32.totalorder %s18, 0
      %p85 = por %p83, %p84
      %p86 = scmp.ne.s32.totalorder %s75, %s78
      %p87 = scmp.eq.s32.totalorder %s23, 6
      %p88 = por %p86, %p87
      %p89 = scmp.ne.s32.totalorder %s78, %s79
      %p90 = scmp.eq.s32.totalorder %s23, 0
      %p91 = por %p89, %p90
      %p92 = scmp.ne.s32.totalorder %s78, %s79
      %p93 = scmp.eq.s32.totalorder %s24, 6
      %p94 = por %p92, %p93
      %p96 = scmp.ne.s32.totalorder %s79, %s95
      %p97 = scmp.eq.s32.totalorder %s24, 0
      %p98 = por %p96, %p97
      %s99 = ssub.s32 %s18, %s25
      %p100 = scmp.eq.s32.totalorder %s99, 0
      %s102 = sadd.s32 %s101, 1
      %s103 = scalar_select %p100, %s101, %s102
      %p106 = pneg %p100
      %p107 = scmp.eq.s32.totalorder %s18, 6
      %p108 = por %p106, %p107
      %p109 = scmp.ne.s32.totalorder %s101, %s104
      %p110 = scmp.eq.s32.totalorder %s18, 0
      %p111 = por %p109, %p110
      %p112 = scmp.ne.s32.totalorder %s101, %s104
      %p113 = scmp.eq.s32.totalorder %s23, 6
      %p114 = por %p112, %p113
      %p115 = scmp.ne.s32.totalorder %s104, %s105
      %p116 = scmp.eq.s32.totalorder %s23, 0
      %p117 = por %p115, %p116
      %p118 = scmp.ne.s32.totalorder %s104, %s105
      %p119 = scmp.eq.s32.totalorder %s24, 6
      %p120 = por %p118, %p119
      %p122 = scmp.ne.s32.totalorder %s105, %s121
      %p123 = scmp.eq.s32.totalorder %s24, 0
      %p124 = por %p122, %p123
      %s125 = ssub.s32 %s18, %s25
      %p126 = scmp.eq.s32.totalorder %s125, 0
      %s128 = sadd.s32 %s127, 1
      %s129 = scalar_select %p126, %s127, %s128
      %p132 = pneg %p126
      %p133 = scmp.eq.s32.totalorder %s18, 6
      %p134 = por %p132, %p133
      %p135 = scmp.ne.s32.totalorder %s127, %s130
      %p136 = scmp.eq.s32.totalorder %s18, 0
      %p137 = por %p135, %p136
      %p138 = scmp.ne.s32.totalorder %s127, %s130
      %p139 = scmp.eq.s32.totalorder %s23, 6
      %p140 = por %p138, %p139
      %p141 = scmp.ne.s32.totalorder %s130, %s131
      %p142 = scmp.eq.s32.totalorder %s23, 0
      %p143 = por %p141, %p142
      %p144 = scmp.ne.s32.totalorder %s130, %s131
      %p145 = scmp.eq.s32.totalorder %s24, 6
      %p146 = por %p144, %p145
      %p148 = scmp.ne.s32.totalorder %s131, %s147
      %p149 = scmp.eq.s32.totalorder %s24, 0
      %p150 = por %p148, %p149
      %s152 = sadd.s32 %s151, 1
      %p155 = scmp.eq.s32.totalorder %s18, 6
      %p156 = scmp.ne.s32.totalorder %s151, %s153
      %p157 = scmp.eq.s32.totalorder %s18, 0
      %p158 = por %p156, %p157
      %p159 = scmp.ne.s32.totalorder %s151, %s153
      %p160 = scmp.eq.s32.totalorder %s23, 6
      %p161 = por %p159, %p160
      %p162 = scmp.ne.s32.totalorder %s153, %s154
      %p163 = scmp.eq.s32.totalorder %s23, 0
      %p164 = por %p162, %p163
      %p165 = scmp.ne.s32.totalorder %s153, %s154
      %p166 = scmp.eq.s32.totalorder %s24, 6
      %p167 = por %p165, %p166
      %p169 = scmp.ne.s32.totalorder %s154, %s168
      %p170 = scmp.eq.s32.totalorder %s24, 0
      %p171 = por %p169, %p170
      %s172 = ssub.s32 %s18, %s25
      %p173 = scmp.eq.s32.totalorder %s172, 0
      %s175 = sadd.s32 %s174, 1
      %s176 = scalar_select %p173, %s174, %s175
      %p179 = pneg %p173
      %p180 = scmp.eq.s32.totalorder %s18, 6
      %p181 = por %p179, %p180
      %p182 = scmp.ne.s32.totalorder %s174, %s177
      %p183 = scmp.eq.s32.totalorder %s18, 0
      %p184 = por %p182, %p183
      %p185 = scmp.ne.s32.totalorder %s174, %s177
      %p186 = scmp.eq.s32.totalorder %s23, 6
      %p187 = por %p185, %p186
      %p188 = scmp.ne.s32.totalorder %s177, %s178
      %p189 = scmp.eq.s32.totalorder %s23, 0
      %p190 = por %p188, %p189
      %p191 = scmp.ne.s32.totalorder %s177, %s178
      %p192 = scmp.eq.s32.totalorder %s24, 6
      %p193 = por %p191, %p192
      %p195 = scmp.ne.s32.totalorder %s178, %s194
      %p196 = scmp.eq.s32.totalorder %s24, 0
      %p197 = por %p195, %p196
      %s199 = sadd.s32 %s198, 1
      %p202 = scmp.eq.s32.totalorder %s18, 6
      %p203 = scmp.ne.s32.totalorder %s198, %s200
      %p204 = scmp.eq.s32.totalorder %s18, 0
      %p205 = por %p203, %p204
      %p206 = scmp.ne.s32.totalorder %s198, %s200
      %p207 = scmp.eq.s32.totalorder %s23, 6
      %p208 = por %p206, %p207
      %p209 = scmp.ne.s32.totalorder %s200, %s201
      %p210 = scmp.eq.s32.totalorder %s23, 0
      %p211 = por %p209, %p210
      %p212 = scmp.ne.s32.totalorder %s200, %s201
      %p213 = scmp.eq.s32.totalorder %s24, 6
      %p214 = por %p212, %p213
      %p216 = scmp.ne.s32.totalorder %s201, %s215
      %p217 = scmp.eq.s32.totalorder %s24, 0
      %p218 = por %p216, %p217
      %s220 = sadd.s32 %s219, 1
      %p223 = scmp.eq.s32.totalorder %s18, 6
      %p224 = scmp.ne.s32.totalorder %s219, %s221
      %p225 = scmp.eq.s32.totalorder %s18, 0
      %p226 = por %p224, %p225
      %p227 = scmp.ne.s32.totalorder %s219, %s221
      %p228 = scmp.eq.s32.totalorder %s23, 6
      %p229 = por %p227, %p228
      %p230 = scmp.ne.s32.totalorder %s221, %s222
      %p231 = scmp.eq.s32.totalorder %s23, 0
      %p232 = por %p230, %p231
      %p233 = scmp.ne.s32.totalorder %s221, %s222
      %p234 = scmp.eq.s32.totalorder %s24, 6
      %p235 = por %p233, %p234
      %p237 = scmp.ne.s32.totalorder %s222, %s236
      %p238 = scmp.eq.s32.totalorder %s24, 0
      %p239 = por %p237, %p238
      %p240 = scmp.le.s32.totalorder 1, %s18
      %p241 = scmp.lt.s32.totalorder %s18, 8
      %p242 = pnand %p240, %p241
      %p243 = pneg %p242
      // Predicated region
      $region9: #{tpu_custom_call.1} parent=5 // pred_check
        _
      $region10: #{tpu_custom_call.1} parent=5 // pred_check_branch
        %245 = sbr.rel (%p242) target = $region12
      $region11: #{tpu_custom_call.1} parent=5 // pred_region
        %s246 = ssub.s32 %s18, 1
        // Predicated region
        $region13: #{tpu_custom_call.1} parent=11 // pred_check
          %p247 = pneg %p39
        $region14: #{tpu_custom_call.1} parent=11 // pred_check_branch
          %249 = sbr.rel (%p247) target = $region16
        $region15: #{tpu_custom_call.1} parent=11 // pred_region
          %251 = vsyncadd [#allocation5], 0
          %s253 = sshll.u32 %s0, 4
          %s254 = int_to_ptr.hbm [resolvable:$true] %s253
          %s255 = sshll.u32 [#allocation4], 4
          %s256 = int_to_ptr.vmem [resolvable:$true] %s255
          %258 = dma.hbm_to_vmem [thread:$0]  %s254, 256, %s256, [#allocation5]
        $region16: #{tpu_custom_call.1} parent=11 // pred_fallthru
          _
        // Predicated region
        $region17: #{tpu_custom_call.1} parent=11 // pred_check
          %p259 = pneg %p164
        $region18: #{tpu_custom_call.1} parent=11 // pred_check_branch
          %261 = sbr.rel (%p259) target = $region20
        $region19: #{tpu_custom_call.1} parent=11 // pred_region
          _
        $region20: #{tpu_custom_call.1} parent=11 // pred_fallthru
          _
        // Predicated region
        $region21: #{tpu_custom_call.1} parent=11 // pred_check
          %p262 = pneg %p211
        $region22: #{tpu_custom_call.1} parent=11 // pred_check_branch
          %264 = sbr.rel (%p262) target = $region24
        $region23: #{tpu_custom_call.1} parent=11 // pred_region
          _
        $region24: #{tpu_custom_call.1} parent=11 // pred_fallthru
          _
      $region12: #{tpu_custom_call.1} parent=5 // pred_fallthru
        _
      %p265 = scmp.lt.s32.totalorder %s18, 7
      // Predicated region
      $region25: #{tpu_custom_call.1} parent=5 // pred_check
        %p266 = pneg %p265
      $region26: #{tpu_custom_call.1} parent=5 // pred_check_branch
        %268 = sbr.rel (%p266) target = $region28
      $region27: #{tpu_custom_call.1} parent=5 // pred_region
        // Predicated region
        $region29: #{tpu_custom_call.1} parent=27 // pred_check
          %p269 = pneg %p59
        $region30: #{tpu_custom_call.1} parent=27 // pred_check_branch
          %271 = sbr.rel (%p269) target = $region32
        $region31: #{tpu_custom_call.1} parent=27 // pred_region
          %p272 = scmp.lt.s32.totalorder %s18, 6
          %s273 = scalar_select %p272, %s18, 6
          %s274 = smul.addr %s273, 2
          %s275 = smul.addr %s274, 4
          %s276 = scalar_lea.vmem %s1, %s275
        $region32: #{tpu_custom_call.1} parent=27 // pred_fallthru
          _
        // Predicated region
        $region33: #{tpu_custom_call.1} parent=27 // pred_check
          %p277 = pneg %p85
        $region34: #{tpu_custom_call.1} parent=27 // pred_check_branch
          %279 = sbr.rel (%p277) target = $region36
        $region35: #{tpu_custom_call.1} parent=27 // pred_region
          %p280 = scmp.lt.s32.totalorder %s18, 6
          %s281 = scalar_select %p280, %s18, 6
          %s282 = smul.addr %s281, 8
          %s283 = scalar_lea.vmem %s2, %s282
        $region36: #{tpu_custom_call.1} parent=27 // pred_fallthru
          _
        // Predicated region
        $region37: #{tpu_custom_call.1} parent=27 // pred_check
          %p284 = pneg %p111
        $region38: #{tpu_custom_call.1} parent=27 // pred_check_branch
          %286 = sbr.rel (%p284) target = $region40
        $region39: #{tpu_custom_call.1} parent=27 // pred_region
          %p287 = scmp.lt.s32.totalorder %s18, 6
          %s288 = scalar_select %p287, %s18, 6
          %s289 = smul.addr %s288, 8
          %s290 = scalar_lea.vmem %s3, %s289
        $region40: #{tpu_custom_call.1} parent=27 // pred_fallthru
          _
        // Predicated region
        $region41: #{tpu_custom_call.1} parent=27 // pred_check
          %p291 = pneg %p137
        $region42: #{tpu_custom_call.1} parent=27 // pred_check_branch
          %293 = sbr.rel (%p291) target = $region44
        $region43: #{tpu_custom_call.1} parent=27 // pred_region
          %p294 = scmp.lt.s32.totalorder %s18, 6
          %s295 = scalar_select %p294, %s18, 6
          %s296 = smul.addr %s295, 8
          %s297 = scalar_lea.vmem %s4, %s296
        $region44: #{tpu_custom_call.1} parent=27 // pred_fallthru
          _
        // Predicated region
        $region45: #{tpu_custom_call.1} parent=27 // pred_check
          %p298 = pneg %p184
        $region46: #{tpu_custom_call.1} parent=27 // pred_check_branch
          %300 = sbr.rel (%p298) target = $region48
        $region47: #{tpu_custom_call.1} parent=27 // pred_region
          %p301 = scmp.lt.s32.totalorder %s18, 6
          %s302 = scalar_select %p301, %s18, 6
          %s303 = scalar_lea.vmem %s6, %s302
        $region48: #{tpu_custom_call.1} parent=27 // pred_fallthru
          _
      $region28: #{tpu_custom_call.1} parent=5 // pred_fallthru
        _
      %p304 = scmp.le.s32.totalorder 1, %s18
      %p305 = scmp.lt.s32.totalorder %s18, 8
      %p306 = pnand %p304, %p305
      %p307 = pneg %p306
      // Predicated region
      $region49: #{tpu_custom_call.1} parent=5 // pred_check
        _
      $region50: #{tpu_custom_call.1} parent=5 // pred_check_branch
        %309 = sbr.rel (%p306) target = $region52
      $region51: #{tpu_custom_call.1} parent=5 // pred_region
        %s310 = ssub.s32 %s18, 1
        // Predicated region
        $region53: #{tpu_custom_call.1} parent=51 // pred_check
          %p311 = pneg %p39
        $region54: #{tpu_custom_call.1} parent=51 // pred_check_branch
          %313 = sbr.rel (%p311) target = $region56
        $region55: #{tpu_custom_call.1} parent=51 // pred_region
          %315 = dma.done [#allocation5], 256
        $region56: #{tpu_custom_call.1} parent=51 // pred_fallthru
          _
        %p316 = pneg %p39
        %p317 = pneg %p36
        %p318 = scmp.lt.s32.totalorder %s23, 6
        %s319 = scalar_select %p318, %s23, 6
        %s320 = smul.addr %s319, 2
        %s321 = smul.addr %s320, 4
        %s322 = scalar_lea.vmem %s1, %s321
        %p323 = pneg %p65
        %p324 = pneg %p62
        %p325 = scmp.lt.s32.totalorder %s23, 6
        %s326 = scalar_select %p325, %s23, 6
        %s327 = smul.addr %s326, 8
        %s328 = scalar_lea.vmem %s2, %s327
        %p329 = pneg %p91
        %p330 = pneg %p88
        %p331 = scmp.lt.s32.totalorder %s23, 6
        %s332 = scalar_select %p331, %s23, 6
        %s333 = smul.addr %s332, 8
        %s334 = scalar_lea.vmem %s3, %s333
        %p335 = pneg %p117
        %p336 = pneg %p114
        %p337 = scmp.lt.s32.totalorder %s23, 6
        %s338 = scalar_select %p337, %s23, 6
        %s339 = smul.addr %s338, 8
        %s340 = scalar_lea.vmem %s4, %s339
        %p341 = pneg %p143
        %p342 = pneg %p140
        %p343 = pneg %p164
        %p344 = pneg %p161
        %p345 = scmp.lt.s32.totalorder %s23, 6
        %s346 = scalar_select %p345, %s23, 6
        %s347 = scalar_lea.vmem %s6, %s346
        %p348 = pneg %p190
        %p349 = pneg %p187
        %p350 = pneg %p211
        %p351 = pneg %p208
        %p352 = pneg %p232
        %p353 = pneg %p229
        %p354 = scmp.lt.s32.totalorder %s23, 6
        %s355 = scalar_select %p354, %s23, 6
        %s356 = smul.addr %s355, 2
        %s357 = smul.addr %s356, 4
        %s358 = scalar_lea.vmem %s1, %s357
        %p359 = scmp.lt.s32.totalorder %s23, 6
        %s360 = scalar_select %p359, %s23, 6
        %s361 = smul.addr %s360, 8
        %s362 = scalar_lea.vmem %s2, %s361
        %p363 = scmp.lt.s32.totalorder %s23, 6
        %s364 = scalar_select %p363, %s23, 6
        %s365 = smul.addr %s364, 8
        %s366 = scalar_lea.vmem %s3, %s365
        %p367 = scmp.lt.s32.totalorder %s23, 6
        %s368 = scalar_select %p367, %s23, 6
        %s369 = smul.addr %s368, 8
        %s370 = scalar_lea.vmem %s4, %s369
        %p371 = scmp.lt.s32.totalorder %s23, 6
        %s372 = scalar_select %p371, %s23, 6
        %s373 = scalar_lea.vmem %s6, %s372
        %p374 = scmp.eq.s32.totalorder %s23, 0
        // Predicated region
        $region57: #{tpu_custom_call.1} parent=51 // pred_check
          %p375 = pneg %p374
        $region58: #{tpu_custom_call.1} parent=51 // pred_check_branch
          %377 = sbr.rel (%p375) target = $region60
        $region59: #{tpu_custom_call.1} parent=51 // pred_region
          %v378 = vld [vmem:[#allocation4] sm:$0xff]
          %v379 = vld [vmem:[#allocation4 + $0x8] sm:$0xff]
          %380 = vst [vmem:[#allocation2] sm:$0xff] %v378
          %381 = vst [vmem:[#allocation2 + $0x8] sm:$0xff] %v379
          %382 = vst [vmem:[#allocation2 + $0x10] sm:$0xff] 0.0
          %383 = vst [vmem:[#allocation2 + $0x18] sm:$0xff] 0.0
          %384 = vst [vmem:[#allocation2 + $0x20] sm:$0xff] 0.0
          %385 = vst [vmem:[#allocation2 + $0x28] sm:$0xff] 0.0
          %386 = vst [vmem:[#allocation2 + $0x30] sm:$0xff] 0.0
          %387 = vst [vmem:[#allocation2 + $0x38] sm:$0xff] 0.0
          %388 = vst [vmem:[#allocation2 + $0x40] sm:$0xff] 0.0
          %389 = vst [vmem:[#allocation2 + $0x48] sm:$0xff] 0.0
          %390 = vst [vmem:[#allocation2 + $0x50] sm:$0xff] 0.0
          %391 = vst [vmem:[#allocation2 + $0x58] sm:$0xff] 0.0
          %392 = vst [vmem:[#allocation2 + $0x60] sm:$0xff] 0.0
          %393 = vst [vmem:[#allocation2 + $0x68] sm:$0xff] 0.0
          %394 = vst [vmem:[#allocation2 + $0x70] sm:$0xff] 0.0
          %395 = vst [vmem:[#allocation2 + $0x78] sm:$0xff] 0.0
          %v396 = vld [vmem:[%s5] sm:$0x1]
          %v397 = vld [vmem:[#allocation4] sm:$0xff]
          %v398 = vld [vmem:[#allocation4 + $0x8] sm:$0xff]
          %vm399 = vcmask 64512
          %v401 = vsel %vm399, %v396, 0
          %403 = vmatpush.msra.mxu0 0.0
          %404 = vmatpush.msra.mxu0 0.0
          %405 = vmatpush.msra.mxu0 0.0
          %406 = vmatpush.msra.mxu0 0.0
          %407 = vmatpush.msra.mxu0 0.0
          %408 = vmatpush.msra.mxu0 0.0
          %409 = vmatpush.msra.mxu0 0.0
          %410 = vmatpush.msra.mxu0 0.0
          %411 = vmatpush.msra.mxu0 0.0
          %412 = vmatpush.msra.mxu0 0.0
          %413 = vmatpush.msra.mxu0 0.0
          %414 = vmatpush.msra.mxu0 0.0
          %415 = vmatpush.msra.mxu0 0.0
          %416 = vmatpush.msra.mxu0 0.0
          %417 = vmatpush.msra.mxu0 0.0
          %418 = vmatpush.msra.mxu0 %v397
          %419 = vmatmul.f32.gmra.mxu0 %v401
          %v420 = vpop.f32.mrf.mxu0
          %v421 = vadd.f32 0.0, %v420
          %422 = vdwg.mxu0
          %423 = vmatpush.msra.mxu0 0.0
          %424 = vmatpush.msra.mxu0 0.0
          %425 = vmatpush.msra.mxu0 0.0
          %426 = vmatpush.msra.mxu0 0.0
          %427 = vmatpush.msra.mxu0 0.0
          %428 = vmatpush.msra.mxu0 0.0
          %429 = vmatpush.msra.mxu0 0.0
          %430 = vmatpush.msra.mxu0 0.0
          %431 = vmatpush.msra.mxu0 0.0
          %432 = vmatpush.msra.mxu0 0.0
          %433 = vmatpush.msra.mxu0 0.0
          %434 = vmatpush.msra.mxu0 0.0
          %435 = vmatpush.msra.mxu0 0.0
          %436 = vmatpush.msra.mxu0 0.0
          %437 = vmatpush.msra.mxu0 0.0
          %438 = vmatpush.msra.mxu0 %v398
          %439 = vmatmul.f32.gmra.mxu0 %v401
          %v440 = vpop.f32.mrf.mxu0
          %v441 = vadd.f32 0.0, %v440
          %442 = vdwg.mxu0
          %v445 = vrot.slane %v441, 7
          %vm446 = vcmask 1040384
          %v447 = vsel %vm446, %v421, %v445
          %v449 = vlaneseq
          %vm450 = vcmp.ge.s32.totalorder %v449, 0
          %vm451 = vcmp.lt.s32.totalorder %v449, 256
          %vm452 = vmand %vm450, %vm451
          %453 = vst.msk [vmem:[#allocation7] sm:$0x3] %vm452, %v447
        $region60: #{tpu_custom_call.1} parent=51 // pred_fallthru
          _
        %v454 = vld [vmem:[%s362] sm:$0xff]
        %v455 = vld [vmem:[#allocation2] sm:$0xff]
        %v456 = vld [vmem:[#allocation2 + $0x8] sm:$0xff]
        %v457 = vld [vmem:[#allocation2 + $0x10] sm:$0xff]
        %v458 = vld [vmem:[#allocation2 + $0x18] sm:$0xff]
        %v459 = vld [vmem:[#allocation2 + $0x20] sm:$0xff]
        %v460 = vld [vmem:[#allocation2 + $0x28] sm:$0xff]
        %v461 = vld [vmem:[#allocation2 + $0x30] sm:$0xff]
        %v462 = vld [vmem:[#allocation2 + $0x38] sm:$0xff]
        %v463 = vld [vmem:[#allocation2 + $0x40] sm:$0xff]
        %v464 = vld [vmem:[#allocation2 + $0x48] sm:$0xff]
        %v465 = vld [vmem:[#allocation2 + $0x50] sm:$0xff]
        %v466 = vld [vmem:[#allocation2 + $0x58] sm:$0xff]
        %v467 = vld [vmem:[#allocation2 + $0x60] sm:$0xff]
        %v468 = vld [vmem:[#allocation2 + $0x68] sm:$0xff]
        %v469 = vld [vmem:[#allocation2 + $0x70] sm:$0xff]
        %v470 = vld [vmem:[#allocation2 + $0x78] sm:$0xff]
        %vm471 = vcmask 523264
        %v473 = vsel %vm471, %v454, 0
        %475 = vmatpush.msra.mxu0 0.0
        %476 = vmatpush.msra.mxu0 0.0
        %477 = vmatpush.msra.mxu0 0.0
        %478 = vmatpush.msra.mxu0 0.0
        %479 = vmatpush.msra.mxu0 0.0
        %480 = vmatpush.msra.mxu0 0.0
        %481 = vmatpush.msra.mxu0 0.0
        %482 = vmatpush.msra.mxu0 0.0
        %483 = vmatpush.msra.mxu0 %v469
        %484 = vmatpush.msra.mxu0 %v467
        %485 = vmatpush.msra.mxu0 %v465
        %486 = vmatpush.msra.mxu0 %v463
        %487 = vmatpush.msra.mxu0 %v461
        %488 = vmatpush.msra.mxu0 %v459
        %489 = vmatpush.msra.mxu0 %v457
        %490 = vmatpush.msra.mxu0 %v455
        %491 = vmatmul.f32.gmra.mxu0 %v473
        %v492 = vpop.f32.mrf.mxu0
        %v493 = vadd.f32 0.0, %v492
        %494 = vdwg.mxu0
        %495 = vmatpush.msra.mxu0 0.0
        %496 = vmatpush.msra.mxu0 0.0
        %497 = vmatpush.msra.mxu0 0.0
        %498 = vmatpush.msra.mxu0 0.0
        %499 = vmatpush.msra.mxu0 0.0
        %500 = vmatpush.msra.mxu0 0.0
        %501 = vmatpush.msra.mxu0 0.0
        %502 = vmatpush.msra.mxu0 0.0
        %503 = vmatpush.msra.mxu0 %v470
        %504 = vmatpush.msra.mxu0 %v468
        %505 = vmatpush.msra.mxu0 %v466
        %506 = vmatpush.msra.mxu0 %v464
        %507 = vmatpush.msra.mxu0 %v462
        %508 = vmatpush.msra.mxu0 %v460
        %509 = vmatpush.msra.mxu0 %v458
        %510 = vmatpush.msra.mxu0 %v456
        %511 = vmatmul.f32.gmra.mxu0 %v473
        %v512 = vpop.f32.mrf.mxu0
        %v513 = vadd.f32 0.0, %v512
        %514 = vdwg.mxu0
        %v515 = vadd.f32 %v493, %v513
        %516 = vadd.xlane.f32.xlu0 %v515
        %v517 = vpop.xlane.xlu0 %516
        %v518 = vmul.f32 %v517, 0.00390625
        %v519 = vsub.f32 %v493, %v518
        %v520 = vsub.f32 %v513, %v518
        %v521 = vmul.f32 %v519, %v519
        %v522 = vmul.f32 %v520, %v520
        %v523 = vadd.f32 %v521, %v522
        %524 = vadd.xlane.f32.xlu0 %v523
        %v525 = vpop.xlane.xlu0 %524
        %v526 = vmul.f32 %v525, 0.00390625
        %v527 = vld [vmem:[%s366] sm:$0xff]
        %v528 = vadd.f32 %v526, 1e-05
        %v529 = vrsqrt.pop %v528
        %v530 = vmul.f32 %v529, %v528
        %v531 = vmul.f32 %v530, %v529
        %v532 = vmul.f32 0.5, %v531
        %v533 = vsub.f32 1.5, %v532
        %v534 = vmul.f32 %v529, %v533
        %vm535 = vweird.f32 %v528
        %vm536 = vweird.f32 %v529
        %vm537 = vmor %vm535, %vm536
        %v538 = vsel %vm537, %v529, %v534
        %v539 = vmul.f32 %v527, %v538
        %541 = vset.pattern.permute.xlu0 0
        %542 = vperm.xlu0 %541, %v539
        %v543 = vpop.permute.xlu0 %542
        %v545 = vmul.f32 %v519, %v543
        %v546 = vmul.f32 %v520, %v543
        %v547 = vld [vmem:[%s370] sm:$0xff]
        %549 = vset.pattern.permute.xlu0 0
        %550 = vperm.xlu0 %549, %v547
        %v551 = vpop.permute.xlu0 %550
        %v553 = vadd.f32 %v545, %v551
        %v554 = vadd.f32 %v546, %v551
        %v555 = vmul.f32 %v553, 0.01
        %v556 = vmul.f32 %v554, 0.01
        %v557 = vmax.f32 %v553, %v555
        %v558 = vmax.f32 %v554, %v556
        %v559 = vld [vmem:[%s358] sm:$0xff]
        %v560 = vunpack.c.l.bf16 %v559
        %v561 = vunpack.c.h.bf16 %v559
        %v562 = vmul.f32 %v560, 0.02
        %v563 = vmul.f32 %v561, 0.02
        %v564 = vadd.f32 %v562, 1.0
        %v565 = vadd.f32 %v563, 1.0
        %v566 = vmul.f32 %v557, %v564
        %v567 = vmul.f32 %v558, %v565
        %s568 = smul.u32 %s23, 8
        %s569 = sadd.s32 %s568, 8
        %s570 = sshra.s32 %s569, 3
        %s571 = sand.u32 %s569, 7
        %s572 = smul.u32 %s570, 2
        %s573 = smul.addr %s572, 8
        %s574 = scalar_lea.vmem [#allocation2], %s573
        %575 = vst [vmem:[%s574] sm:$0xff] %v566
        %576 = vst [vmem:[%s574 + $0x8] sm:$0xff] %v567
        %v577 = vld [vmem:[#allocation7] sm:$0x3]
        %v578 = vld [vmem:[%s373] sm:$0x1]
        %vm579 = vcmask 64512
        %v581 = vsel %vm579, %v578, 0
        %583 = vmatpush.msra.mxu0 0.0
        %584 = vmatpush.msra.mxu0 0.0
        %585 = vmatpush.msra.mxu0 0.0
        %586 = vmatpush.msra.mxu0 0.0
        %587 = vmatpush.msra.mxu0 0.0
        %588 = vmatpush.msra.mxu0 0.0
        %589 = vmatpush.msra.mxu0 0.0
        %590 = vmatpush.msra.mxu0 0.0
        %591 = vmatpush.msra.mxu0 0.0
        %592 = vmatpush.msra.mxu0 0.0
        %593 = vmatpush.msra.mxu0 0.0
        %594 = vmatpush.msra.mxu0 0.0
        %595 = vmatpush.msra.mxu0 0.0
        %596 = vmatpush.msra.mxu0 0.0
        %597 = vmatpush.msra.mxu0 0.0
        %598 = vmatpush.msra.mxu0 %v566
        %599 = vmatmul.f32.gmra.mxu0 %v581
        %v600 = vpop.f32.mrf.mxu0
        %v601 = vadd.f32 0.0, %v600
        %602 = vdwg.mxu0
        %603 = vmatpush.msra.mxu0 0.0
        %604 = vmatpush.msra.mxu0 0.0
        %605 = vmatpush.msra.mxu0 0.0
        %606 = vmatpush.msra.mxu0 0.0
        %607 = vmatpush.msra.mxu0 0.0
        %608 = vmatpush.msra.mxu0 0.0
        %609 = vmatpush.msra.mxu0 0.0
        %610 = vmatpush.msra.mxu0 0.0
        %611 = vmatpush.msra.mxu0 0.0
        %612 = vmatpush.msra.mxu0 0.0
        %613 = vmatpush.msra.mxu0 0.0
        %614 = vmatpush.msra.mxu0 0.0
        %615 = vmatpush.msra.mxu0 0.0
        %616 = vmatpush.msra.mxu0 0.0
        %617 = vmatpush.msra.mxu0 0.0
        %618 = vmatpush.msra.mxu0 %v567
        %619 = vmatmul.f32.gmra.mxu0 %v581
        %v620 = vpop.f32.mrf.mxu0
        %v621 = vadd.f32 0.0, %v620
        %622 = vdwg.mxu0
        %v625 = vrot.slane %v621, 7
        %vm626 = vcmask 1040384
        %v627 = vsel %vm626, %v601, %v625
        %v629 = vadd.f32 %v577, %v627
        %v630 = vlaneseq
        %vm631 = vcmp.ge.s32.totalorder %v630, 0
        %vm632 = vcmp.lt.s32.totalorder %v630, 256
        %vm633 = vmand %vm631, %vm632
        %634 = vst.msk [vmem:[#allocation7] sm:$0x3] %vm633, %v629
        %p635 = scmp.eq.s32.totalorder %s23, 6
        // Predicated region
        $region61: #{tpu_custom_call.1} parent=51 // pred_check
          %p636 = pneg %p635
        $region62: #{tpu_custom_call.1} parent=51 // pred_check_branch
          %638 = sbr.rel (%p636) target = $region64
        $region63: #{tpu_custom_call.1} parent=51 // pred_region
          %v639 = vld [vmem:[#allocation7] sm:$0x3]
          %v640 = vld [vmem:[#allocation3] sm:$0x1]
          %642 = vset.pattern.permute.xlu0 0
          %643 = vperm.xlu0 %642, %v640
          %v644 = vpop.permute.xlu0 %643
          %v646 = vperm.slane %v644, 0
          %v647 = vadd.f32 %v639, %v646
          %v648 = vmul.f32 %v647, 0.5
          %v649 = vtanh.pop %v648
          %v650 = vmul.f32 %v649, 0.5
          %v651 = vadd.f32 %v650, 0.5
          %652 = vst.msk [vmem:[#allocation7] sm:$0x3] %vm633, %v651
        $region64: #{tpu_custom_call.1} parent=51 // pred_fallthru
          _
        // Predicated region
        $region65: #{tpu_custom_call.1} parent=51 // pred_check
          %p653 = pneg %p229
        $region66: #{tpu_custom_call.1} parent=51 // pred_check_branch
          %655 = sbr.rel (%p653) target = $region68
        $region67: #{tpu_custom_call.1} parent=51 // pred_region
          %657 = vsyncadd [#allocation6], 0
          %s659 = sshll.u32 [#allocation7], 4
          %s660 = int_to_ptr.vmem [resolvable:$true] %s659
          %s661 = sshll.u32 %s8, 4
          %s662 = int_to_ptr.hbm [resolvable:$true] %s661
          %664 = dma.vmem_to_hbm [thread:$0]  %s660, 32, %s662, [#allocation6]
        $region68: #{tpu_custom_call.1} parent=51 // pred_fallthru
          _
        // Predicated region
        $region69: #{tpu_custom_call.1} parent=51 // pred_check
          %p665 = pneg %p229
        $region70: #{tpu_custom_call.1} parent=51 // pred_check_branch
          %667 = sbr.rel (%p665) target = $region72
        $region71: #{tpu_custom_call.1} parent=51 // pred_region
          %669 = dma.done [#allocation6], 32
        $region72: #{tpu_custom_call.1} parent=51 // pred_fallthru
          _
      $region52: #{tpu_custom_call.1} parent=5 // pred_fallthru
        _
      %p670 = scmp.le.s32.totalorder 2, %s18
      // Predicated region
      $region73: #{tpu_custom_call.1} parent=5 // pred_check
        %p671 = pneg %p670
      $region74: #{tpu_custom_call.1} parent=5 // pred_check_branch
        %673 = sbr.rel (%p671) target = $region76
      $region75: #{tpu_custom_call.1} parent=5 // pred_region
        %s674 = ssub.s32 %s18, 2
      $region76: #{tpu_custom_call.1} parent=5 // pred_fallthru
        _
    $region6: #{tpu_custom_call.1} parent=1 // loop_footer
      %s22 = sadd.s32 1, %s18
    $region7: #{tpu_custom_call.1} parent=1 // loop_footer_branch
      %17 = sbr.rel target = $region3
    $region8: #{tpu_custom_call.1} parent=1 // loop_exit
      _
    %675 = vsyncpa [#allocation5], 1
    %s676 = scalar_lea.sflag [#allocation5], 1
    %677 = vsyncpa %s676, 1
    %678 = vsyncpa [#allocation6], 1
    %s679 = scalar_lea.sflag [#allocation6], 1
    %680 = vsyncpa %s679, 1

</llo_original>
